<compile_context>
chip_gen: v6e
topology: v6e:2x2x1
jax: 0.10.0
libtpu: 0.0.40
codegen_flags: <defaults>
</compile_context>

<pallas_src>
import functools

import numpy as np

import jax
import jax.numpy as jnp
from jax.experimental import pallas as pl
from jax.experimental.pallas import tpu as pltpu


def _round_up(v: int, m: int) -> int:
    return ((v + m - 1) // m) * m


def _make_linear_kernel(p: float, has_bias: bool, use_dropout: bool):
    inv_keep = 1.0 / (1.0 - p) if (use_dropout and p < 1.0) else 1.0
    # Integer dropout threshold: keep iff bits >= p * 2^32  =>  P[keep] = 1 - p.
    threshold = np.uint32(min(int(round(p * 4294967296.0)), 4294967295))

    def kernel(*args):
        idx = 0
        m_ref = args[idx]; idx += 1
        x_ref = args[idx]; idx += 1
        b_ref = None
        bits_ref = None
        if has_bias:
            b_ref = args[idx]; idx += 1
        if use_dropout:
            bits_ref = args[idx]; idx += 1
        o_ref = args[idx]; idx += 1
        acc_ref = args[idx]

        k = pl.program_id(2)

        @pl.when(k == 0)
        def _init():
            if has_bias:
                # Fold the bias into the accumulator init (saves an epilogue add).
                acc_ref[...] = jnp.broadcast_to(
                    b_ref[...].astype(jnp.float32), acc_ref.shape)
            else:
                acc_ref[...] = jnp.zeros_like(acc_ref)

        # MXU matmul with f32 accumulation.
        acc_ref[...] += jnp.dot(m_ref[...], x_ref[...],
                                preferred_element_type=jnp.float32)

        @pl.when(k == pl.num_programs(2) - 1)
        def _finalize():
            res = acc_ref[...]
            if use_dropout:
                keep = bits_ref[...] >= threshold          # one compare
                res = jnp.where(keep, res * inv_keep, 0.0)  # one select
            o_ref[...] = res.astype(o_ref.dtype)

    return kernel


@functools.partial(
    jax.jit, static_argnames=("p", "has_bias", "training", "compute_dtype"))
def linear_forward(M, x, b=None, key=None, *, p=0.5, has_bias=False,
                   training=True, compute_dtype=None):
    d_out, d_in = M.shape
    d_in_x, n_cols = x.shape
    assert d_in == d_in_x

    out_dtype = jnp.promote_types(M.dtype, x.dtype)

    # Degenerate case: p >= 1 in training drops everything.
    if training and p >= 1.0:
        return jnp.zeros((d_out, n_cols), out_dtype)

    use_dropout = bool(training) and p > 0.0

    if compute_dtype is not None:
        # bf16 operands (f32 accumulation) for full MXU rate on v6e/v7x.
        M = M.astype(compute_dtype)
        x = x.astype(compute_dtype)

    # ---- tile sizes: MXU-aligned, lane-dense, conservative VMEM budget ----
    # (256x512 f32 tiles double-buffered stay well under the smallest scoped
    #  VMEM default across v5e/v6e/v7x; small problems use the minimal legal
    #  (8,128)-aligned tile.)
    tm = 256 if d_out >= 256 else _round_up(d_out, 8)
    tn = 256 if n_cols >= 256 else _round_up(n_cols, 128)
    tk = 512 if d_in >= 512 else _round_up(d_in, 128)

    mp = _round_up(d_out, tm)
    kp = _round_up(d_in, tk)
    np_pad = _round_up(n_cols, tn)

    M_p = jnp.pad(M, ((0, mp - d_out), (0, kp - d_in)))
    x_p = jnp.pad(x, ((0, kp - d_in), (0, np_pad - n_cols)))

    grid = (mp // tm, np_pad // tn, kp // tk)

    in_specs = [
        pl.BlockSpec((tm, tk), lambda i, j, k: (i, k)),   # M tile
        pl.BlockSpec((tk, tn), lambda i, j, k: (k, j)),   # x tile
    ]
    operands = [M_p, x_p]

    if has_bias:
        b_p = jnp.pad(b.astype(jnp.float32), ((0, mp - d_out), (0, 0)))
        in_specs.append(pl.BlockSpec((tm, 1), lambda i, j, k: (i, 0)))
        operands.append(b_p)

    if use_dropout:
        # Per-output-element random bits -> each (i, j) tile gets its own,
        # uncorrelated dropout mask.
        bits = jax.random.bits(key, (mp, np_pad), dtype=jnp.uint32)
        in_specs.append(pl.BlockSpec((tm, tn), lambda i, j, k: (i, j)))
        operands.append(bits)

    kernel = _make_linear_kernel(float(p), has_bias, use_dropout)

    out_p = pl.pallas_call(
        kernel,
        out_shape=jax.ShapeDtypeStruct((mp, np_pad), out_dtype),
        grid_spec=pltpu.PrefetchScalarGridSpec(
            num_scalar_prefetch=0,
            grid=grid,
            in_specs=in_specs,
            out_specs=pl.BlockSpec((tm, tn), lambda i, j, k: (i, j)),
            scratch_shapes=[pltpu.VMEM((tm, tn), jnp.float32)],
        ),
        compiler_params=pltpu.CompilerParams(
            dimension_semantics=("parallel", "parallel", "arbitrary")),
    )(*operands)

    return out_p[:d_out, :n_cols]


if __name__ == "__main__":
    # Small deterministic setup consistent with the module:
    #   Linear(d_in=32, d_out=8, bias=True, dropout=0.5), x: (d_in, N).
    d_in, d_out, N = 32, 8, 128
    key = jax.random.PRNGKey(0)
    k_m, k_x, k_drop = jax.random.split(key, 3)

    M = jax.random.normal(k_m, (d_out, d_in), dtype=jnp.float32) / (d_in ** 0.5)
    b = jnp.ones((d_out, 1), dtype=jnp.float32)
    x = jax.random.normal(k_x, (d_in, N), dtype=jnp.float32)

    ref = M @ x + b

    # 1) Deterministic (eval / no-dropout) path vs. plain JAX reference.
    out_eval = linear_forward(M, x, b, k_drop, p=0.5, has_bias=True,
                              training=False)
    jax.block_until_ready(out_eval)
    assert out_eval.shape == (d_out, N)
    assert jnp.allclose(out_eval, ref, atol=1e-5, rtol=1e-5)

    # 2) Training-mode forward (dropout active, p=0.5 like the torch default).
    out = linear_forward(M, x, b, k_drop, p=0.5, has_bias=True, training=True)
    jax.block_until_ready(out)
    assert out.shape == (d_out, N)
    # Inverted-dropout semantics: every element is either 0 or 2x its
    # pre-dropout value.
    ok = jnp.isclose(out, 0.0) | jnp.isclose(out, ref * 2.0, atol=1e-4,
                                             rtol=1e-4)
    assert bool(jnp.all(ok))

    # 3) bf16-operand path (f32 accumulation) — the fast path on v6e/v7x.
    out_bf16 = linear_forward(M, x, b, k_drop, p=0.5, has_bias=True,
                              training=False, compute_dtype=jnp.bfloat16)
    jax.block_until_ready(out_bf16)
    assert out_bf16.shape == (d_out, N)
    assert float(jnp.max(jnp.abs(out_bf16 - ref))) < 0.1

    print("KERNEL_OK")
</pallas_src>

<mosaic_0001>
module attributes {stable_mosaic.version = 11 : i64} {
  func.func @kernel(%arg0: i32, %arg1: i32, %arg2: i32, %arg3: memref<8x128xf32, #tpu.memory_space<vmem>>, %arg4: memref<128x128xf32, #tpu.memory_space<vmem>>, %arg5: memref<8x1xf32, #tpu.memory_space<vmem>>, %arg6: memref<8x128xf32, #tpu.memory_space<vmem>>, %arg7: memref<8x128xf32, #tpu.memory_space<vmem>>) attributes {dimension_semantics = [#tpu.dimension_semantics<parallel>, #tpu.dimension_semantics<parallel>, #tpu.dimension_semantics<arbitrary>], iteration_bounds = array<i64: 1, 1, 1>, scalar_prefetch = 0 : i64, scratch_operands = 1 : i64, tpu.core_type = #tpu.core_type<tc>, window_params = [{transform_indices = @transform_0, window_bounds = array<i64: 8, 128>}, {transform_indices = @transform_1, window_bounds = array<i64: 128, 128>}, {transform_indices = @transform_2, window_bounds = array<i64: 8, 1>}, {transform_indices = @transform_3, window_bounds = array<i64: 8, 128>}]} {
    %c0_i32 = arith.constant 0 : i32
    %0 = arith.cmpi eq, %arg2, %c0_i32 : i32
    %1 = arith.extui %0 : i1 to i32
    %c0_i32_0 = arith.constant 0 : i32
    %2 = arith.cmpi ne, %1, %c0_i32_0 : i32
    scf.if %2 {
      %c0_10 = arith.constant 0 : index
      %c0_11 = arith.constant 0 : index
      %12 = vector.load %arg5[%c0_10, %c0_11] : memref<8x1xf32, #tpu.memory_space<vmem>>, vector<8x1xf32>
      %13 = vector.shape_cast %12 : vector<8x1xf32> to vector<8x1xf32>
      %14 = vector.broadcast %13 : vector<8x1xf32> to vector<8x128xf32>
      %c0_12 = arith.constant 0 : index
      %c0_13 = arith.constant 0 : index
      %15 = vector.load %arg7[%c0_12, %c0_13] : memref<8x128xf32, #tpu.memory_space<vmem>>, vector<8x128xf32>
      tpu.vector_store %arg7[%c0_12, %c0_13], %14 {strides = array<i32>} : memref<8x128xf32, #tpu.memory_space<vmem>>, vector<8x128xf32>,
    } else {
    }
    %c0 = arith.constant 0 : index
    %c0_1 = arith.constant 0 : index
    %3 = vector.load %arg7[%c0, %c0_1] : memref<8x128xf32, #tpu.memory_space<vmem>>, vector<8x128xf32>
    %c0_2 = arith.constant 0 : index
    %c0_3 = arith.constant 0 : index
    %4 = vector.load %arg3[%c0_2, %c0_3] : memref<8x128xf32, #tpu.memory_space<vmem>>, vector<8x128xf32>
    %c0_4 = arith.constant 0 : index
    %c0_5 = arith.constant 0 : index
    %5 = vector.load %arg4[%c0_4, %c0_5] : memref<128x128xf32, #tpu.memory_space<vmem>>, vector<128x128xf32>
    %cst = arith.constant dense<0.000000e+00> : vector<8x128xf32>
    %6 = tpu.matmul %4, %5, %cst {dimension_numbers = #tpu.dot_dimension_numbers<[1], [0], [0], [1], [0, 0, 1, 1], [], []>} : vector<8x128xf32>, vector<128x128xf32>, vector<8x128xf32> -> vector<8x128xf32>
    %7 = arith.addf %3, %6 : vector<8x128xf32>
    %c0_6 = arith.constant 0 : index
    %c0_7 = arith.constant 0 : index
    %8 = vector.load %arg7[%c0_6, %c0_7] : memref<8x128xf32, #tpu.memory_space<vmem>>, vector<8x128xf32>
    tpu.vector_store %arg7[%c0_6, %c0_7], %7 {strides = array<i32>} : memref<8x128xf32, #tpu.memory_space<vmem>>, vector<8x128xf32>,
    %c0_i32_8 = arith.constant 0 : i32
    %9 = arith.cmpi eq, %arg2, %c0_i32_8 : i32
    %10 = arith.extui %9 : i1 to i32
    %c0_i32_9 = arith.constant 0 : i32
    %11 = arith.cmpi ne, %10, %c0_i32_9 : i32
    scf.if %11 {
      %c0_10 = arith.constant 0 : index
      %c0_11 = arith.constant 0 : index
      %12 = vector.load %arg7[%c0_10, %c0_11] : memref<8x128xf32, #tpu.memory_space<vmem>>, vector<8x128xf32>
      %c0_12 = arith.constant 0 : index
      %c0_13 = arith.constant 0 : index
      %13 = vector.load %arg6[%c0_12, %c0_13] : memref<8x128xf32, #tpu.memory_space<vmem>>, vector<8x128xf32>
      tpu.vector_store %arg6[%c0_12, %c0_13], %12 {strides = array<i32>} : memref<8x128xf32, #tpu.memory_space<vmem>>, vector<8x128xf32>,
    } else {
    }
    return
  }
  func.func @transform_0(%arg0: i32, %arg1: i32, %arg2: i32) -> (i32, i32) {
    %c0_i32 = arith.constant 0 : i32
    return %arg0, %arg2 : i32, i32
  }
  func.func @transform_1(%arg0: i32, %arg1: i32, %arg2: i32) -> (i32, i32) {
    %c0_i32 = arith.constant 0 : i32
    return %arg2, %arg1 : i32, i32
  }
  func.func @transform_2(%arg0: i32, %arg1: i32, %arg2: i32) -> (i32, i32) {
    %c0_i32 = arith.constant 0 : i32
    %c0_i32_0 = arith.constant 0 : i32
    return %arg0, %c0_i32 : i32, i32
  }
  func.func @transform_3(%arg0: i32, %arg1: i32, %arg2: i32) -> (i32, i32) {
    %c0_i32 = arith.constant 0 : i32
    return %arg0, %arg1 : i32, i32
  }
}

</mosaic_0001>

<llo_original>
// kernel: linear_forward.1
$region0: #{linear_forward.1}
  #allocation0 [shape = 'u32[]', space=smem, size = 0x4, offset = 0x4, fixed_abs, tag = 'smem constant byte address 0x4 - core index']
  #allocation1 [shape = 'u32[144,128]{1,0:T(1,128)}', space=vmem, size = 0x12000, scoped, tag = 'internal scratch']
  #allocation2 [shape = 'f32[8,128]{1,0:T(8,128)}', space=vmem, size = 0x1000, scoped, tag = 'scratch operand']
  %s0 = inlined_call_operand.vmem [shape: f32[8,128], index: 0, kind: input, shape index: {}]
  %s1 = inlined_call_operand.vmem [shape: f32[128,128], index: 1, kind: input, shape index: {}]
  %s2 = inlined_call_operand.vmem [shape: f32[8,1], index: 2, kind: input, shape index: {}]
  %s3 = inlined_call_operand.hbm [shape: f32[8,128], index: 3, kind: output, shape index: {}]
  %s4 = sld [smem:[#allocation0]]
  $region30: #{linear_forward.1} parent=0
    _
  %s6 = ssub.s32 1, %s4
  %s7 = scalar_select 0, %s6, %s4
  $region1: #{linear_forward.1} parent=0
    #allocation3 [shape = 'u8[4096]{0}', space=vmem, size = 0x1000, scoped, tag = 'output window, operand 0, single buffered']
    #allocation4 [shape = 's32[1]{0}', space=sflag, size = 0x4, scoped, tag = 'scoped memory for linear_forward.1']
    %8 = vsyncpa [#allocation4], 0
    // Predicated region
    $region2: #{linear_forward.1} parent=1 // pred_check
      _
    $region3: #{linear_forward.1} parent=1 // pred_check_branch
      %10 = sbr.rel (0) target = $region5
    $region4: #{linear_forward.1} parent=1 // pred_region
      _
    $region5: #{linear_forward.1} parent=1 // pred_fallthru
      _
    // Predicated region
    $region6: #{linear_forward.1} parent=1 // pred_check
      _
    $region7: #{linear_forward.1} parent=1 // pred_check_branch
      %12 = sbr.rel (0) target = $region9
    $region8: #{linear_forward.1} parent=1 // pred_region
      _
    $region9: #{linear_forward.1} parent=1 // pred_fallthru
      _
    // Predicated region
    $region10: #{linear_forward.1} parent=1 // pred_check
      _
    $region11: #{linear_forward.1} parent=1 // pred_check_branch
      %14 = sbr.rel (0) target = $region13
    $region12: #{linear_forward.1} parent=1 // pred_region
      _
    $region13: #{linear_forward.1} parent=1 // pred_fallthru
      _
    %p15 = scmp.eq.s32.totalorder 0, 0
    // Predicated region
    $region14: #{linear_forward.1} parent=1 // pred_check
      %p16 = pneg %p15
    $region15: #{linear_forward.1} parent=1 // pred_check_branch
      %18 = sbr.rel (%p16) target = $region17
    $region16: #{linear_forward.1} parent=1 // pred_region
      %v19 = vld [vmem:[%s2] sm:$0xff]
      %21 = vset.pattern.permute.xlu0 0
      %22 = vperm.xlu0 %21, %v19
      %v23 = vpop.permute.xlu0 %22
      %25 = vst [vmem:[#allocation2] sm:$0xff] %v23
    $region17: #{linear_forward.1} parent=1 // pred_fallthru
      _
    %v26 = vld [vmem:[#allocation2] sm:$0xff]
    %v27 = vld [vmem:[%s0] sm:$0xff]
    %v28 = vld [vmem:[%s1] sm:$0xff]
    %v29 = vld [vmem:[%s1 + $0x8] sm:$0xff]
    %v30 = vld [vmem:[%s1 + $0x10] sm:$0xff]
    %v31 = vld [vmem:[%s1 + $0x18] sm:$0xff]
    %v32 = vld [vmem:[%s1 + $0x20] sm:$0xff]
    %v33 = vld [vmem:[%s1 + $0x28] sm:$0xff]
    %v34 = vld [vmem:[%s1 + $0x30] sm:$0xff]
    %v35 = vld [vmem:[%s1 + $0x38] sm:$0xff]
    %v36 = vld [vmem:[%s1 + $0x40] sm:$0xff]
    %v37 = vld [vmem:[%s1 + $0x48] sm:$0xff]
    %v38 = vld [vmem:[%s1 + $0x50] sm:$0xff]
    %v39 = vld [vmem:[%s1 + $0x58] sm:$0xff]
    %v40 = vld [vmem:[%s1 + $0x60] sm:$0xff]
    %v41 = vld [vmem:[%s1 + $0x68] sm:$0xff]
    %v42 = vld [vmem:[%s1 + $0x70] sm:$0xff]
    %v43 = vld [vmem:[%s1 + $0x78] sm:$0xff]
    %44 = vmatprep.subr.mxu0 0.0
    %45 = vmatpush1.msra.mxu0 %v43
    %46 = vmatprep.subr.mxu0 0.0
    %47 = vmatpush1.msra.mxu0 %v42
    %48 = vmatprep.subr.mxu0 0.0
    %49 = vmatpush1.msra.mxu0 %v41
    %50 = vmatprep.subr.mxu0 0.0
    %51 = vmatpush1.msra.mxu0 %v40
    %52 = vmatprep.subr.mxu0 0.0
    %53 = vmatpush1.msra.mxu0 %v39
    %54 = vmatprep.subr.mxu0 0.0
    %55 = vmatpush1.msra.mxu0 %v38
    %56 = vmatprep.subr.mxu0 0.0
    %57 = vmatpush1.msra.mxu0 %v37
    %58 = vmatprep.subr.mxu0 0.0
    %59 = vmatpush1.msra.mxu0 %v36
    %60 = vmatprep.subr.mxu0 0.0
    %61 = vmatpush1.msra.mxu0 %v35
    %62 = vmatprep.subr.mxu0 0.0
    %63 = vmatpush1.msra.mxu0 %v34
    %64 = vmatprep.subr.mxu0 0.0
    %65 = vmatpush1.msra.mxu0 %v33
    %66 = vmatprep.subr.mxu0 0.0
    %67 = vmatpush1.msra.mxu0 %v32
    %68 = vmatprep.subr.mxu0 0.0
    %69 = vmatpush1.msra.mxu0 %v31
    %70 = vmatprep.subr.mxu0 0.0
    %71 = vmatpush1.msra.mxu0 %v30
    %72 = vmatprep.subr.mxu0 0.0
    %73 = vmatpush1.msra.mxu0 %v29
    %74 = vmatprep.subr.mxu0 0.0
    %75 = vmatpush1.msra.mxu0 %v28
    %76 = vmatprep.subr.mxu0 0.0
    %77 = vmatpush2.msra.mxu0 0.0
    %78 = vmatprep.subr.mxu0 0.0
    %79 = vmatpush2.msra.mxu0 0.0
    %80 = vmatprep.subr.mxu0 0.0
    %81 = vmatpush2.msra.mxu0 0.0
    %82 = vmatprep.subr.mxu0 0.0
    %83 = vmatpush2.msra.mxu0 0.0
    %84 = vmatprep.subr.mxu0 0.0
    %85 = vmatpush2.msra.mxu0 0.0
    %86 = vmatprep.subr.mxu0 0.0
    %87 = vmatpush2.msra.mxu0 0.0
    %88 = vmatprep.subr.mxu0 0.0
    %89 = vmatpush2.msra.mxu0 0.0
    %90 = vmatprep.subr.mxu0 0.0
    %91 = vmatpush2.msra.mxu0 0.0
    %92 = vmatprep.subr.mxu0 0.0
    %93 = vmatpush2.msra.mxu0 0.0
    %94 = vmatprep.subr.mxu0 0.0
    %95 = vmatpush2.msra.mxu0 0.0
    %96 = vmatprep.subr.mxu0 0.0
    %97 = vmatpush2.msra.mxu0 0.0
    %98 = vmatprep.subr.mxu0 0.0
    %99 = vmatpush2.msra.mxu0 0.0
    %100 = vmatprep.subr.mxu0 0.0
    %101 = vmatpush2.msra.mxu0 0.0
    %102 = vmatprep.subr.mxu0 0.0
    %103 = vmatpush2.msra.mxu0 0.0
    %104 = vmatprep.subr.mxu0 0.0
    %105 = vmatpush2.msra.mxu0 0.0
    %106 = vmatprep.subr.mxu0 0.0
    %107 = vmatpush2.msra.mxu0 0.0
    %108 = vmatprep.mubr.f32.mxu0 0.0
    %109 = vmatmul.mubr.f32.gmra.mxu0 %v27
    %v110 = vpop.f32.mrf.mxu0
    %v111 = vadd.f32 0.0, %v110
    %v112 = vpop.f32.mrf.mxu0
    %113 = vdwg.mxu0
    %v114 = vadd.f32 %v26, %v111
    %115 = vst [vmem:[#allocation2] sm:$0xff] %v114
    // Predicated region
    $region18: #{linear_forward.1} parent=1 // pred_check
      %p116 = pneg %p15
    $region19: #{linear_forward.1} parent=1 // pred_check_branch
      %118 = sbr.rel (%p116) target = $region21
    $region20: #{linear_forward.1} parent=1 // pred_region
      %v119 = vld [vmem:[#allocation2] sm:$0xff]
      %120 = vst [vmem:[#allocation3] sm:$0xff] %v119
    $region21: #{linear_forward.1} parent=1 // pred_fallthru
      _
    // Predicated region
    $region22: #{linear_forward.1} parent=1 // pred_check
      _
    $region23: #{linear_forward.1} parent=1 // pred_check_branch
      %122 = sbr.rel (0) target = $region25
    $region24: #{linear_forward.1} parent=1 // pred_region
      %s124 = ssub.s32 128, 128
      %125 = vsyncadd [#allocation4], %s124
      %s127 = sshll.u32 [#allocation3], 4
      %s128 = int_to_ptr.vmem [resolvable:$true] %s127
      %130 = dma.vmem_to_hbm [thread:$0]  %s128, 128, %s3, [#allocation4]
    $region25: #{linear_forward.1} parent=1 // pred_fallthru
      _
    // Predicated region
    $region26: #{linear_forward.1} parent=1 // pred_check
      _
    $region27: #{linear_forward.1} parent=1 // pred_check_branch
      %132 = sbr.rel (0) target = $region29
    $region28: #{linear_forward.1} parent=1 // pred_region
      %133 = dma.done [#allocation4], 128
    $region29: #{linear_forward.1} parent=1 // pred_fallthru
      _
    %134 = vsyncpa [#allocation4], 1

</llo_original>
